<compile_context>
chip_gen: v5e
topology: v5e:2x2
jax: 0.10.0
libtpu: 0.0.40
codegen_flags: <defaults>
</compile_context>

<pallas_src>
import functools

import jax
import jax.numpy as jnp
from jax.experimental import pallas as pl
from jax.experimental.pallas import tpu as pltpu

BN_EPS = 1e-5
LEAKY_SLOPE = 0.01  # nn.LeakyReLU default


def _round_up(n, m):
    return ((n + m - 1) // m) * m


def _tower_kernel(num_layers, f_in, fp, x_ref, p_ref, out_ref):
    """Whole tower forward in VMEM (single invocation, full batch resident).

    x_ref  : (B, f_in)       input activations
    p_ref  : (L, Fp+8, Fp)   per layer: rows [0:Fp] = W^T (in, out) zero padded,
                             row Fp = gamma (pad=1), row Fp+1 = beta (pad=0)
    out_ref: (B, Fp)         lane-dense output slab; real output is column 0
    """
    batch = x_ref.shape[0]
    inv_b = jnp.float32(1.0 / batch)
    ones_row = jnp.ones((1, batch), jnp.float32)  # hoisted once, reused per layer

    h = x_ref[...].astype(jnp.float32)            # (B, f_in)
    for i in range(num_layers):                   # static unroll
        # Layer 0 only needs the first f_in weight rows: slice the Ref on an
        # 8-sublane-aligned boundary, then trim the value if f_in % 8 != 0.
        rows = _round_up(f_in, 8) if i == 0 else fp
        w = p_ref[i, :rows, :]                    # (rows, Fp) ref-level slice
        if i == 0 and rows != f_in:
            w = w[:f_in, :]

        # Linear (bias omitted: cancelled exactly by the BN mean subtraction)
        h = jnp.dot(h, w, preferred_element_type=jnp.float32)      # (B, Fp)

        # BatchNorm1d training statistics, sums on the MXU (centered two-pass)
        mean = jnp.dot(ones_row, h, preferred_element_type=jnp.float32) * inv_b
        c = h - mean
        var = jnp.dot(ones_row, c * c, preferred_element_type=jnp.float32) * inv_b

        gb = p_ref[i, fp:fp + 2, :]                                # (2, Fp)
        scale = gb[0:1, :] * jax.lax.rsqrt(var + BN_EPS)           # fused BN scale
        h = c * scale + gb[1:2, :]

        # LeakyReLU: single mul + max
        h = jnp.maximum(h, LEAKY_SLOPE * h)

        # Dropout: identity (see TODO at top of file)

    out_ref[...] = h.astype(out_ref.dtype)


def init_tower_params(key, input_size, tower_sizes):
    """Deterministic init mimicking PyTorch defaults (U(-k, k), k=1/sqrt(fan_in)).

    Weights are stored already transposed to (in, out).  The bias is generated
    for reference-parity but is NOT used by the kernel (BN cancels it).
    """
    sizes = [input_size] + list(tower_sizes) + [1]
    params = []
    for i in range(len(sizes) - 1):
        fan_in, fan_out = sizes[i], sizes[i + 1]
        key, kw, kb = jax.random.split(key, 3)
        bound = 1.0 / float(fan_in) ** 0.5
        w_t = jax.random.uniform(kw, (fan_in, fan_out), jnp.float32, -bound, bound)
        b = jax.random.uniform(kb, (fan_out,), jnp.float32, -bound, bound)
        gamma = jnp.ones((fan_out,), jnp.float32)   # BN weight default
        beta = jnp.zeros((fan_out,), jnp.float32)   # BN bias default
        params.append((w_t, b, gamma, beta))
    return params


def pack_tower_params(params):
    """One-time packing of all layers into a single lane-dense slab.

    Returns (slab (L, Fp+8, Fp), Fp).  Per layer: rows [0:Fp] hold the
    pre-transposed, zero-padded weight; row Fp holds gamma; row Fp+1 holds
    beta.  Linear bias intentionally omitted (cancelled by train-mode BN).
    """
    num_layers = len(params)
    dims = [params[0][0].shape[0]] + [p[0].shape[1] for p in params]
    fp = _round_up(max(dims), 128)                 # lane-dense feature padding
    slab = jnp.zeros((num_layers, fp + 8, fp), jnp.float32)
    slab = slab.at[:, fp, :].set(1.0)              # padded gamma = 1 (harmless)
    for i, (w_t, _b, g, be) in enumerate(params):
        fi, fo = w_t.shape
        slab = slab.at[i, :fi, :fo].set(w_t)
        slab = slab.at[i, fp, :fo].set(g)
        slab = slab.at[i, fp + 1, :fo].set(be)
    return slab, fp


def tower_forward(x, param_slab):
    """Runs the whole tower in one pallas_call; returns (B, 1)."""
    batch, f_in = x.shape
    num_layers, _, fp = param_slab.shape

    vmem = pl.BlockSpec(memory_space=pltpu.MemorySpace.VMEM)
    kernel = functools.partial(_tower_kernel, num_layers, f_in, fp)
    out_pad = pl.pallas_call(
        kernel,
        out_shape=jax.ShapeDtypeStruct((batch, fp), jnp.float32),
        in_specs=[vmem, vmem],
        out_specs=vmem,
    )(x, param_slab)
    return out_pad[:, :1]


def tower_reference(x, params):
    """Pure-JAX reference (includes the bias, which BN then cancels)."""
    h = x.astype(jnp.float32)
    for (w_t, b, g, be) in params:
        h = h @ w_t + b[None, :]
        mean = jnp.mean(h, axis=0, keepdims=True)
        var = jnp.mean((h - mean) ** 2, axis=0, keepdims=True)
        h = (h - mean) / jnp.sqrt(var + BN_EPS) * g[None, :] + be[None, :]
        h = jnp.where(h > 0, h, LEAKY_SLOPE * h)
    return h


if __name__ == "__main__":
    input_size = 32
    tower_sizes = [16, 8]
    batch = 8

    key = jax.random.PRNGKey(0)
    key_x, key_p = jax.random.split(key)
    x = jax.random.normal(key_x, (batch, input_size), dtype=jnp.float32)
    params = init_tower_params(key_p, input_size, tower_sizes)
    param_slab, _fp = pack_tower_params(params)     # one-time packing

    out = tower_forward(x, param_slab)
    out = jax.block_until_ready(out)

    ref = tower_reference(x, params)
    assert out.shape == (batch, 1), out.shape
    assert jnp.allclose(out, ref, atol=1e-4, rtol=1e-4), (
        f"mismatch: max abs diff {jnp.max(jnp.abs(out - ref))}")

    print("KERNEL_OK")
</pallas_src>

<mosaic_0001>
module attributes {stable_mosaic.version = 11 : i64} {
  func.func @_tower_kernel(%arg0: memref<8x32xf32, #tpu.memory_space<vmem>>, %arg1: memref<3x136x128xf32, #tpu.memory_space<vmem>>, %arg2: memref<8x128xf32, #tpu.memory_space<vmem>>) attributes {dimension_semantics = [], scalar_prefetch = 0 : i64, scratch_operands = 0 : i64, tpu.core_type = #tpu.core_type<tc>} {
    %cst = arith.constant 1.000000e+00 : f32
    %0 = vector.broadcast %cst : f32 to vector<1x8xf32>
    %c0 = arith.constant 0 : index
    %c0_0 = arith.constant 0 : index
    %1 = vector.load %arg0[%c0, %c0_0] : memref<8x32xf32, #tpu.memory_space<vmem>>, vector<8x32xf32>
    %c0_1 = arith.constant 0 : index
    %c0_2 = arith.constant 0 : index
    %c0_3 = arith.constant 0 : index
    %2 = vector.load %arg1[%c0_1, %c0_2, %c0_3] : memref<3x136x128xf32, #tpu.memory_space<vmem>>, vector<1x32x128xf32>
    %3 = vector.shape_cast %2 : vector<1x32x128xf32> to vector<32x128xf32>
    %cst_4 = arith.constant dense<0.000000e+00> : vector<8x128xf32>
    %4 = tpu.matmul %1, %3, %cst_4 {dimension_numbers = #tpu.dot_dimension_numbers<[1], [0], [0], [1], [0, 0, 1, 1], [], []>} : vector<8x32xf32>, vector<32x128xf32>, vector<8x128xf32> -> vector<8x128xf32>
    %cst_5 = arith.constant dense<0.000000e+00> : vector<1x128xf32>
    %5 = tpu.matmul %0, %4, %cst_5 {dimension_numbers = #tpu.dot_dimension_numbers<[1], [0], [0], [1], [0, 0, 1, 1], [], []>} : vector<1x8xf32>, vector<8x128xf32>, vector<1x128xf32> -> vector<1x128xf32>
    %cst_6 = arith.constant 1.250000e-01 : f32
    %6 = vector.broadcast %cst_6 : f32 to vector<1x128xf32>
    %7 = arith.mulf %5, %6 : vector<1x128xf32>
    %8 = vector.broadcast %7 : vector<1x128xf32> to vector<8x128xf32>
    %9 = arith.subf %4, %8 : vector<8x128xf32>
    %10 = arith.mulf %9, %9 : vector<8x128xf32>
    %cst_7 = arith.constant dense<0.000000e+00> : vector<1x128xf32>
    %11 = tpu.matmul %0, %10, %cst_7 {dimension_numbers = #tpu.dot_dimension_numbers<[1], [0], [0], [1], [0, 0, 1, 1], [], []>} : vector<1x8xf32>, vector<8x128xf32>, vector<1x128xf32> -> vector<1x128xf32>
    %cst_8 = arith.constant 1.250000e-01 : f32
    %12 = vector.broadcast %cst_8 : f32 to vector<1x128xf32>
    %13 = arith.mulf %11, %12 : vector<1x128xf32>
    %c0_9 = arith.constant 0 : index
    %c128 = arith.constant 128 : index
    %c0_10 = arith.constant 0 : index
    %14 = vector.load %arg1[%c0_9, %c128, %c0_10] : memref<3x136x128xf32, #tpu.memory_space<vmem>>, vector<1x2x128xf32>
    %15 = vector.shape_cast %14 : vector<1x2x128xf32> to vector<2x128xf32>
    %16 = vector.extract_strided_slice %15 {offsets = [0, 0], sizes = [1, 128], strides = [1, 1]} : vector<2x128xf32> to vector<1x128xf32>
    %cst_11 = arith.constant 9.99999974E-6 : f32
    %17 = vector.broadcast %cst_11 : f32 to vector<1x128xf32>
    %18 = arith.addf %13, %17 : vector<1x128xf32>
    %19 = math.rsqrt %18 : vector<1x128xf32>
    %20 = arith.mulf %16, %19 : vector<1x128xf32>
    %21 = vector.broadcast %20 : vector<1x128xf32> to vector<8x128xf32>
    %22 = arith.mulf %9, %21 : vector<8x128xf32>
    %23 = vector.extract_strided_slice %15 {offsets = [1, 0], sizes = [1, 128], strides = [1, 1]} : vector<2x128xf32> to vector<1x128xf32>
    %24 = vector.broadcast %23 : vector<1x128xf32> to vector<8x128xf32>
    %25 = arith.addf %22, %24 : vector<8x128xf32>
    %cst_12 = arith.constant 0.00999999977 : f32
    %26 = vector.broadcast %cst_12 : f32 to vector<8x128xf32>
    %27 = arith.mulf %26, %25 : vector<8x128xf32>
    %28 = arith.maximumf %25, %27 : vector<8x128xf32>
    %c1 = arith.constant 1 : index
    %c0_13 = arith.constant 0 : index
    %c0_14 = arith.constant 0 : index
    %29 = vector.load %arg1[%c1, %c0_13, %c0_14] : memref<3x136x128xf32, #tpu.memory_space<vmem>>, vector<1x128x128xf32>
    %30 = vector.shape_cast %29 : vector<1x128x128xf32> to vector<128x128xf32>
    %cst_15 = arith.constant dense<0.000000e+00> : vector<8x128xf32>
    %31 = tpu.matmul %28, %30, %cst_15 {dimension_numbers = #tpu.dot_dimension_numbers<[1], [0], [0], [1], [0, 0, 1, 1], [], []>} : vector<8x128xf32>, vector<128x128xf32>, vector<8x128xf32> -> vector<8x128xf32>
    %cst_16 = arith.constant dense<0.000000e+00> : vector<1x128xf32>
    %32 = tpu.matmul %0, %31, %cst_16 {dimension_numbers = #tpu.dot_dimension_numbers<[1], [0], [0], [1], [0, 0, 1, 1], [], []>} : vector<1x8xf32>, vector<8x128xf32>, vector<1x128xf32> -> vector<1x128xf32>
    %cst_17 = arith.constant 1.250000e-01 : f32
    %33 = vector.broadcast %cst_17 : f32 to vector<1x128xf32>
    %34 = arith.mulf %32, %33 : vector<1x128xf32>
    %35 = vector.broadcast %34 : vector<1x128xf32> to vector<8x128xf32>
    %36 = arith.subf %31, %35 : vector<8x128xf32>
    %37 = arith.mulf %36, %36 : vector<8x128xf32>
    %cst_18 = arith.constant dense<0.000000e+00> : vector<1x128xf32>
    %38 = tpu.matmul %0, %37, %cst_18 {dimension_numbers = #tpu.dot_dimension_numbers<[1], [0], [0], [1], [0, 0, 1, 1], [], []>} : vector<1x8xf32>, vector<8x128xf32>, vector<1x128xf32> -> vector<1x128xf32>
    %cst_19 = arith.constant 1.250000e-01 : f32
    %39 = vector.broadcast %cst_19 : f32 to vector<1x128xf32>
    %40 = arith.mulf %38, %39 : vector<1x128xf32>
    %c1_20 = arith.constant 1 : index
    %c128_21 = arith.constant 128 : index
    %c0_22 = arith.constant 0 : index
    %41 = vector.load %arg1[%c1_20, %c128_21, %c0_22] : memref<3x136x128xf32, #tpu.memory_space<vmem>>, vector<1x2x128xf32>
    %42 = vector.shape_cast %41 : vector<1x2x128xf32> to vector<2x128xf32>
    %43 = vector.extract_strided_slice %42 {offsets = [0, 0], sizes = [1, 128], strides = [1, 1]} : vector<2x128xf32> to vector<1x128xf32>
    %cst_23 = arith.constant 9.99999974E-6 : f32
    %44 = vector.broadcast %cst_23 : f32 to vector<1x128xf32>
    %45 = arith.addf %40, %44 : vector<1x128xf32>
    %46 = math.rsqrt %45 : vector<1x128xf32>
    %47 = arith.mulf %43, %46 : vector<1x128xf32>
    %48 = vector.broadcast %47 : vector<1x128xf32> to vector<8x128xf32>
    %49 = arith.mulf %36, %48 : vector<8x128xf32>
    %50 = vector.extract_strided_slice %42 {offsets = [1, 0], sizes = [1, 128], strides = [1, 1]} : vector<2x128xf32> to vector<1x128xf32>
    %51 = vector.broadcast %50 : vector<1x128xf32> to vector<8x128xf32>
    %52 = arith.addf %49, %51 : vector<8x128xf32>
    %cst_24 = arith.constant 0.00999999977 : f32
    %53 = vector.broadcast %cst_24 : f32 to vector<8x128xf32>
    %54 = arith.mulf %53, %52 : vector<8x128xf32>
    %55 = arith.maximumf %52, %54 : vector<8x128xf32>
    %c2 = arith.constant 2 : index
    %c0_25 = arith.constant 0 : index
    %c0_26 = arith.constant 0 : index
    %56 = vector.load %arg1[%c2, %c0_25, %c0_26] : memref<3x136x128xf32, #tpu.memory_space<vmem>>, vector<1x128x128xf32>
    %57 = vector.shape_cast %56 : vector<1x128x128xf32> to vector<128x128xf32>
    %cst_27 = arith.constant dense<0.000000e+00> : vector<8x128xf32>
    %58 = tpu.matmul %55, %57, %cst_27 {dimension_numbers = #tpu.dot_dimension_numbers<[1], [0], [0], [1], [0, 0, 1, 1], [], []>} : vector<8x128xf32>, vector<128x128xf32>, vector<8x128xf32> -> vector<8x128xf32>
    %cst_28 = arith.constant dense<0.000000e+00> : vector<1x128xf32>
    %59 = tpu.matmul %0, %58, %cst_28 {dimension_numbers = #tpu.dot_dimension_numbers<[1], [0], [0], [1], [0, 0, 1, 1], [], []>} : vector<1x8xf32>, vector<8x128xf32>, vector<1x128xf32> -> vector<1x128xf32>
    %cst_29 = arith.constant 1.250000e-01 : f32
    %60 = vector.broadcast %cst_29 : f32 to vector<1x128xf32>
    %61 = arith.mulf %59, %60 : vector<1x128xf32>
    %62 = vector.broadcast %61 : vector<1x128xf32> to vector<8x128xf32>
    %63 = arith.subf %58, %62 : vector<8x128xf32>
    %64 = arith.mulf %63, %63 : vector<8x128xf32>
    %cst_30 = arith.constant dense<0.000000e+00> : vector<1x128xf32>
    %65 = tpu.matmul %0, %64, %cst_30 {dimension_numbers = #tpu.dot_dimension_numbers<[1], [0], [0], [1], [0, 0, 1, 1], [], []>} : vector<1x8xf32>, vector<8x128xf32>, vector<1x128xf32> -> vector<1x128xf32>
    %cst_31 = arith.constant 1.250000e-01 : f32
    %66 = vector.broadcast %cst_31 : f32 to vector<1x128xf32>
    %67 = arith.mulf %65, %66 : vector<1x128xf32>
    %c2_32 = arith.constant 2 : index
    %c128_33 = arith.constant 128 : index
    %c0_34 = arith.constant 0 : index
    %68 = vector.load %arg1[%c2_32, %c128_33, %c0_34] : memref<3x136x128xf32, #tpu.memory_space<vmem>>, vector<1x2x128xf32>
    %69 = vector.shape_cast %68 : vector<1x2x128xf32> to vector<2x128xf32>
    %70 = vector.extract_strided_slice %69 {offsets = [0, 0], sizes = [1, 128], strides = [1, 1]} : vector<2x128xf32> to vector<1x128xf32>
    %cst_35 = arith.constant 9.99999974E-6 : f32
    %71 = vector.broadcast %cst_35 : f32 to vector<1x128xf32>
    %72 = arith.addf %67, %71 : vector<1x128xf32>
    %73 = math.rsqrt %72 : vector<1x128xf32>
    %74 = arith.mulf %70, %73 : vector<1x128xf32>
    %75 = vector.broadcast %74 : vector<1x128xf32> to vector<8x128xf32>
    %76 = arith.mulf %63, %75 : vector<8x128xf32>
    %77 = vector.extract_strided_slice %69 {offsets = [1, 0], sizes = [1, 128], strides = [1, 1]} : vector<2x128xf32> to vector<1x128xf32>
    %78 = vector.broadcast %77 : vector<1x128xf32> to vector<8x128xf32>
    %79 = arith.addf %76, %78 : vector<8x128xf32>
    %cst_36 = arith.constant 0.00999999977 : f32
    %80 = vector.broadcast %cst_36 : f32 to vector<8x128xf32>
    %81 = arith.mulf %80, %79 : vector<8x128xf32>
    %82 = arith.maximumf %79, %81 : vector<8x128xf32>
    %c0_37 = arith.constant 0 : index
    %c0_38 = arith.constant 0 : index
    %83 = vector.load %arg2[%c0_37, %c0_38] : memref<8x128xf32, #tpu.memory_space<vmem>>, vector<8x128xf32>
    tpu.vector_store %arg2[%c0_37, %c0_38], %82 {strides = array<i32>} : memref<8x128xf32, #tpu.memory_space<vmem>>, vector<8x128xf32>,
    return
  }
}

</mosaic_0001>

<llo_original>
// kernel: tpu_custom_call.1
$region0: #{tpu_custom_call.1}
  #allocation0 [shape = 'u32[]', space=smem, size = 0x4, offset = 0x4, fixed_abs, tag = 'smem constant byte address 0x4 - core index']
  #allocation1 [shape = 'u32[72,128]{1,0:T(1,128)}', space=vmem, size = 0x9000, scoped, tag = 'internal scratch']
  %s0 = inlined_call_operand.hbm [shape: f32[8,32], index: 0, kind: input, shape index: {}]
  %s1 = inlined_call_operand.hbm [shape: f32[3,136,128], index: 1, kind: input, shape index: {}]
  %s2 = inlined_call_operand.hbm [shape: f32[8,128], index: 2, kind: output, shape index: {}]
  %s3 = sld [smem:[#allocation0]]
  $region26: #{tpu_custom_call.1} parent=0
    _
  %s5 = ssub.s32 1, %s3
  %s6 = scalar_select 0, %s5, %s3
  $region1: #{tpu_custom_call.1} parent=0
    #allocation2 [shape = 'u8[4096]{0}', space=vmem, size = 0x1000, scoped, tag = 'input window, operand 0, single buffered']
    #allocation3 [shape = 's32[1]{0}', space=sflag, size = 0x4, scoped, tag = 'scoped memory for tpu_custom_call.1']
    #allocation4 [shape = 's32[1]{0}', space=sflag, size = 0x4, scoped, tag = 'scoped memory for tpu_custom_call.1']
    #allocation5 [shape = 'u8[208896]{0}', space=vmem, size = 0x33000, scoped, tag = 'input window, operand 1, single buffered']
    #allocation6 [shape = 's32[1]{0}', space=sflag, size = 0x4, scoped, tag = 'scoped memory for tpu_custom_call.1']
    #allocation7 [shape = 'u8[4096]{0}', space=vmem, size = 0x1000, scoped, tag = 'output window, operand 0, single buffered']
    %7 = vsyncpa [#allocation3], 0
    %8 = vsyncpa [#allocation6], 0
    %9 = vsyncpa [#allocation4], 0
    // Predicated region
    $region2: #{tpu_custom_call.1} parent=1 // pred_check
      _
    $region3: #{tpu_custom_call.1} parent=1 // pred_check_branch
      %11 = sbr.rel (0) target = $region5
    $region4: #{tpu_custom_call.1} parent=1 // pred_region
      %13 = vsyncadd [#allocation3], 0
      %s15 = sshll.u32 %s0, 4
      %s16 = int_to_ptr.hbm [resolvable:$true] %s15
      %s17 = sshll.u32 [#allocation2], 4
      %s18 = int_to_ptr.vmem [resolvable:$true] %s17
      %20 = dma.hbm_to_vmem [thread:$0]  %s16, 128, %s18, [#allocation3]
    $region5: #{tpu_custom_call.1} parent=1 // pred_fallthru
      _
    // Predicated region
    $region6: #{tpu_custom_call.1} parent=1 // pred_check
      _
    $region7: #{tpu_custom_call.1} parent=1 // pred_check_branch
      %22 = sbr.rel (0) target = $region9
    $region8: #{tpu_custom_call.1} parent=1 // pred_region
      %24 = vsyncadd [#allocation6], 0
      %s25 = sshll.u32 %s1, 4
      %s26 = int_to_ptr.hbm [resolvable:$true] %s25
      %s27 = sshll.u32 [#allocation5], 4
      %s28 = int_to_ptr.vmem [resolvable:$true] %s27
      %33 = dma.hbm_to_vmem [thread:$0]  %s26, 6528, %s28, [#allocation6], 128, 128, 8
    $region9: #{tpu_custom_call.1} parent=1 // pred_fallthru
      _
    // Predicated region
    $region10: #{tpu_custom_call.1} parent=1 // pred_check
      _
    $region11: #{tpu_custom_call.1} parent=1 // pred_check_branch
      %35 = sbr.rel (0) target = $region13
    $region12: #{tpu_custom_call.1} parent=1 // pred_region
      %37 = dma.done [#allocation3], 128
    $region13: #{tpu_custom_call.1} parent=1 // pred_fallthru
      _
    // Predicated region
    $region14: #{tpu_custom_call.1} parent=1 // pred_check
      _
    $region15: #{tpu_custom_call.1} parent=1 // pred_check_branch
      %39 = sbr.rel (0) target = $region17
    $region16: #{tpu_custom_call.1} parent=1 // pred_region
      %41 = dma.done [#allocation6], 6528
    $region17: #{tpu_custom_call.1} parent=1 // pred_fallthru
      _
    %v42 = vld [vmem:[#allocation2] sm:$0xff]
    %v43 = vld [vmem:[#allocation5] sm:$0xff]
    %v44 = vld [vmem:[#allocation5 + $0x8] sm:$0xff]
    %v45 = vld [vmem:[#allocation5 + $0x10] sm:$0xff]
    %v46 = vld [vmem:[#allocation5 + $0x18] sm:$0xff]
    %vm47 = vcmask 261120
    %v49 = vsel %vm47, %v42, 0
    %51 = vmatpush.msra.mxu0 0.0
    %52 = vmatpush.msra.mxu0 0.0
    %53 = vmatpush.msra.mxu0 0.0
    %54 = vmatpush.msra.mxu0 0.0
    %55 = vmatpush.msra.mxu0 0.0
    %56 = vmatpush.msra.mxu0 0.0
    %57 = vmatpush.msra.mxu0 0.0
    %58 = vmatpush.msra.mxu0 0.0
    %59 = vmatpush.msra.mxu0 0.0
    %60 = vmatpush.msra.mxu0 0.0
    %61 = vmatpush.msra.mxu0 0.0
    %62 = vmatpush.msra.mxu0 0.0
    %63 = vmatpush.msra.mxu0 %v46
    %64 = vmatpush.msra.mxu0 %v45
    %65 = vmatpush.msra.mxu0 %v44
    %66 = vmatpush.msra.mxu0 %v43
    %67 = vmatmul.f32.gmra.mxu0 %v49
    %v68 = vpop.f32.mrf.mxu0
    %v69 = vadd.f32 0.0, %v68
    %70 = vdwg.mxu0
    %vm71 = vcmask 64512
    %v73 = vsel %vm71, 1.0, 0
    %75 = vmatpush.msra.mxu0 0.0
    %76 = vmatpush.msra.mxu0 0.0
    %77 = vmatpush.msra.mxu0 0.0
    %78 = vmatpush.msra.mxu0 0.0
    %79 = vmatpush.msra.mxu0 0.0
    %80 = vmatpush.msra.mxu0 0.0
    %81 = vmatpush.msra.mxu0 0.0
    %82 = vmatpush.msra.mxu0 0.0
    %83 = vmatpush.msra.mxu0 0.0
    %84 = vmatpush.msra.mxu0 0.0
    %85 = vmatpush.msra.mxu0 0.0
    %86 = vmatpush.msra.mxu0 0.0
    %87 = vmatpush.msra.mxu0 0.0
    %88 = vmatpush.msra.mxu0 0.0
    %89 = vmatpush.msra.mxu0 0.0
    %90 = vmatpush.msra.mxu0 %v69
    %91 = vmatmul.f32.gmra.mxu0 %v73
    %v92 = vpop.f32.mrf.mxu0
    %v93 = vadd.f32 0.0, %v92
    %94 = vdwg.mxu0
    %v95 = vmul.f32 %v93, 0.125
    %v96 = vperm.slane %v95, 0
    %v97 = vsub.f32 %v69, %v96
    %v98 = vmul.f32 %v97, %v97
    %99 = vmatpush.msra.mxu0 0.0
    %100 = vmatpush.msra.mxu0 0.0
    %101 = vmatpush.msra.mxu0 0.0
    %102 = vmatpush.msra.mxu0 0.0
    %103 = vmatpush.msra.mxu0 0.0
    %104 = vmatpush.msra.mxu0 0.0
    %105 = vmatpush.msra.mxu0 0.0
    %106 = vmatpush.msra.mxu0 0.0
    %107 = vmatpush.msra.mxu0 0.0
    %108 = vmatpush.msra.mxu0 0.0
    %109 = vmatpush.msra.mxu0 0.0
    %110 = vmatpush.msra.mxu0 0.0
    %111 = vmatpush.msra.mxu0 0.0
    %112 = vmatpush.msra.mxu0 0.0
    %113 = vmatpush.msra.mxu0 0.0
    %114 = vmatpush.msra.mxu0 %v98
    %115 = vmatmul.f32.gmra.mxu0 %v73
    %v116 = vpop.f32.mrf.mxu0
    %v117 = vadd.f32 0.0, %v116
    %118 = vdwg.mxu0
    %v119 = vmul.f32 %v117, 0.125
    %v120 = vld [vmem:[#allocation5 + $0x80] sm:$0x3]
    %v121 = vadd.f32 %v119, 1e-05
    %v122 = vrsqrt.pop %v121
    %v123 = vmul.f32 %v122, %v121
    %v124 = vmul.f32 %v123, %v122
    %v125 = vmul.f32 0.5, %v124
    %v126 = vsub.f32 1.5, %v125
    %v127 = vmul.f32 %v122, %v126
    %vm128 = vweird.f32 %v121
    %vm129 = vweird.f32 %v122
    %vm130 = vmor %vm128, %vm129
    %v131 = vsel %vm130, %v122, %v127
    %v132 = vmul.f32 %v120, %v131
    %v133 = vperm.slane %v132, 0
    %v134 = vmul.f32 %v97, %v133
    %v135 = vperm.slane %v120, 1
    %v136 = vadd.f32 %v134, %v135
    %v137 = vmul.f32 %v136, 0.01
    %v138 = vmax.f32 %v136, %v137
    %s139 = scalar_lea.vmem [#allocation5], 136
    %v140 = vld [vmem:[%s139] sm:$0xff]
    %v141 = vld [vmem:[%s139 + $0x8] sm:$0xff]
    %v142 = vld [vmem:[%s139 + $0x10] sm:$0xff]
    %v143 = vld [vmem:[%s139 + $0x18] sm:$0xff]
    %v144 = vld [vmem:[%s139 + $0x20] sm:$0xff]
    %v145 = vld [vmem:[%s139 + $0x28] sm:$0xff]
    %v146 = vld [vmem:[%s139 + $0x30] sm:$0xff]
    %v147 = vld [vmem:[%s139 + $0x38] sm:$0xff]
    %v148 = vld [vmem:[%s139 + $0x40] sm:$0xff]
    %v149 = vld [vmem:[%s139 + $0x48] sm:$0xff]
    %v150 = vld [vmem:[%s139 + $0x50] sm:$0xff]
    %v151 = vld [vmem:[%s139 + $0x58] sm:$0xff]
    %v152 = vld [vmem:[%s139 + $0x60] sm:$0xff]
    %v153 = vld [vmem:[%s139 + $0x68] sm:$0xff]
    %v154 = vld [vmem:[%s139 + $0x70] sm:$0xff]
    %v155 = vld [vmem:[%s139 + $0x78] sm:$0xff]
    %156 = vmatpush.msra.mxu0 %v155
    %157 = vmatpush.msra.mxu0 %v154
    %158 = vmatpush.msra.mxu0 %v153
    %159 = vmatpush.msra.mxu0 %v152
    %160 = vmatpush.msra.mxu0 %v151
    %161 = vmatpush.msra.mxu0 %v150
    %162 = vmatpush.msra.mxu0 %v149
    %163 = vmatpush.msra.mxu0 %v148
    %164 = vmatpush.msra.mxu0 %v147
    %165 = vmatpush.msra.mxu0 %v146
    %166 = vmatpush.msra.mxu0 %v145
    %167 = vmatpush.msra.mxu0 %v144
    %168 = vmatpush.msra.mxu0 %v143
    %169 = vmatpush.msra.mxu0 %v142
    %170 = vmatpush.msra.mxu0 %v141
    %171 = vmatpush.msra.mxu0 %v140
    %172 = vmatmul.f32.gmra.mxu0 %v138
    %v173 = vpop.f32.mrf.mxu0
    %v174 = vadd.f32 0.0, %v173
    %175 = vdwg.mxu0
    %176 = vmatpush.msra.mxu0 0.0
    %177 = vmatpush.msra.mxu0 0.0
    %178 = vmatpush.msra.mxu0 0.0
    %179 = vmatpush.msra.mxu0 0.0
    %180 = vmatpush.msra.mxu0 0.0
    %181 = vmatpush.msra.mxu0 0.0
    %182 = vmatpush.msra.mxu0 0.0
    %183 = vmatpush.msra.mxu0 0.0
    %184 = vmatpush.msra.mxu0 0.0
    %185 = vmatpush.msra.mxu0 0.0
    %186 = vmatpush.msra.mxu0 0.0
    %187 = vmatpush.msra.mxu0 0.0
    %188 = vmatpush.msra.mxu0 0.0
    %189 = vmatpush.msra.mxu0 0.0
    %190 = vmatpush.msra.mxu0 0.0
    %191 = vmatpush.msra.mxu0 %v174
    %192 = vmatmul.f32.gmra.mxu0 %v73
    %v193 = vpop.f32.mrf.mxu0
    %v194 = vadd.f32 0.0, %v193
    %195 = vdwg.mxu0
    %v196 = vmul.f32 %v194, 0.125
    %v197 = vperm.slane %v196, 0
    %v198 = vsub.f32 %v174, %v197
    %v199 = vmul.f32 %v198, %v198
    %200 = vmatpush.msra.mxu0 0.0
    %201 = vmatpush.msra.mxu0 0.0
    %202 = vmatpush.msra.mxu0 0.0
    %203 = vmatpush.msra.mxu0 0.0
    %204 = vmatpush.msra.mxu0 0.0
    %205 = vmatpush.msra.mxu0 0.0
    %206 = vmatpush.msra.mxu0 0.0
    %207 = vmatpush.msra.mxu0 0.0
    %208 = vmatpush.msra.mxu0 0.0
    %209 = vmatpush.msra.mxu0 0.0
    %210 = vmatpush.msra.mxu0 0.0
    %211 = vmatpush.msra.mxu0 0.0
    %212 = vmatpush.msra.mxu0 0.0
    %213 = vmatpush.msra.mxu0 0.0
    %214 = vmatpush.msra.mxu0 0.0
    %215 = vmatpush.msra.mxu0 %v199
    %216 = vmatmul.f32.gmra.mxu0 %v73
    %v217 = vpop.f32.mrf.mxu0
    %v218 = vadd.f32 0.0, %v217
    %219 = vdwg.mxu0
    %v220 = vmul.f32 %v218, 0.125
    %v221 = vld [vmem:[%s139 + $0x80] sm:$0x3]
    %v222 = vadd.f32 %v220, 1e-05
    %v223 = vrsqrt.pop %v222
    %v224 = vmul.f32 %v223, %v222
    %v225 = vmul.f32 %v224, %v223
    %v226 = vmul.f32 0.5, %v225
    %v227 = vsub.f32 1.5, %v226
    %v228 = vmul.f32 %v223, %v227
    %vm229 = vweird.f32 %v222
    %vm230 = vweird.f32 %v223
    %vm231 = vmor %vm229, %vm230
    %v232 = vsel %vm231, %v223, %v228
    %v233 = vmul.f32 %v221, %v232
    %v234 = vperm.slane %v233, 0
    %v235 = vmul.f32 %v198, %v234
    %v236 = vperm.slane %v221, 1
    %v237 = vadd.f32 %v235, %v236
    %v238 = vmul.f32 %v237, 0.01
    %v239 = vmax.f32 %v237, %v238
    %s240 = scalar_lea.vmem [#allocation5], 272
    %v241 = vld [vmem:[%s240] sm:$0xff]
    %v242 = vld [vmem:[%s240 + $0x8] sm:$0xff]
    %v243 = vld [vmem:[%s240 + $0x10] sm:$0xff]
    %v244 = vld [vmem:[%s240 + $0x18] sm:$0xff]
    %v245 = vld [vmem:[%s240 + $0x20] sm:$0xff]
    %v246 = vld [vmem:[%s240 + $0x28] sm:$0xff]
    %v247 = vld [vmem:[%s240 + $0x30] sm:$0xff]
    %v248 = vld [vmem:[%s240 + $0x38] sm:$0xff]
    %v249 = vld [vmem:[%s240 + $0x40] sm:$0xff]
    %v250 = vld [vmem:[%s240 + $0x48] sm:$0xff]
    %v251 = vld [vmem:[%s240 + $0x50] sm:$0xff]
    %v252 = vld [vmem:[%s240 + $0x58] sm:$0xff]
    %v253 = vld [vmem:[%s240 + $0x60] sm:$0xff]
    %v254 = vld [vmem:[%s240 + $0x68] sm:$0xff]
    %v255 = vld [vmem:[%s240 + $0x70] sm:$0xff]
    %v256 = vld [vmem:[%s240 + $0x78] sm:$0xff]
    %257 = vmatpush.msra.mxu0 %v256
    %258 = vmatpush.msra.mxu0 %v255
    %259 = vmatpush.msra.mxu0 %v254
    %260 = vmatpush.msra.mxu0 %v253
    %261 = vmatpush.msra.mxu0 %v252
    %262 = vmatpush.msra.mxu0 %v251
    %263 = vmatpush.msra.mxu0 %v250
    %264 = vmatpush.msra.mxu0 %v249
    %265 = vmatpush.msra.mxu0 %v248
    %266 = vmatpush.msra.mxu0 %v247
    %267 = vmatpush.msra.mxu0 %v246
    %268 = vmatpush.msra.mxu0 %v245
    %269 = vmatpush.msra.mxu0 %v244
    %270 = vmatpush.msra.mxu0 %v243
    %271 = vmatpush.msra.mxu0 %v242
    %272 = vmatpush.msra.mxu0 %v241
    %273 = vmatmul.f32.gmra.mxu0 %v239
    %v274 = vpop.f32.mrf.mxu0
    %v275 = vadd.f32 0.0, %v274
    %276 = vdwg.mxu0
    %277 = vmatpush.msra.mxu0 0.0
    %278 = vmatpush.msra.mxu0 0.0
    %279 = vmatpush.msra.mxu0 0.0
    %280 = vmatpush.msra.mxu0 0.0
    %281 = vmatpush.msra.mxu0 0.0
    %282 = vmatpush.msra.mxu0 0.0
    %283 = vmatpush.msra.mxu0 0.0
    %284 = vmatpush.msra.mxu0 0.0
    %285 = vmatpush.msra.mxu0 0.0
    %286 = vmatpush.msra.mxu0 0.0
    %287 = vmatpush.msra.mxu0 0.0
    %288 = vmatpush.msra.mxu0 0.0
    %289 = vmatpush.msra.mxu0 0.0
    %290 = vmatpush.msra.mxu0 0.0
    %291 = vmatpush.msra.mxu0 0.0
    %292 = vmatpush.msra.mxu0 %v275
    %293 = vmatmul.f32.gmra.mxu0 %v73
    %v294 = vpop.f32.mrf.mxu0
    %v295 = vadd.f32 0.0, %v294
    %296 = vdwg.mxu0
    %v297 = vmul.f32 %v295, 0.125
    %v298 = vperm.slane %v297, 0
    %v299 = vsub.f32 %v275, %v298
    %v300 = vmul.f32 %v299, %v299
    %301 = vmatpush.msra.mxu0 0.0
    %302 = vmatpush.msra.mxu0 0.0
    %303 = vmatpush.msra.mxu0 0.0
    %304 = vmatpush.msra.mxu0 0.0
    %305 = vmatpush.msra.mxu0 0.0
    %306 = vmatpush.msra.mxu0 0.0
    %307 = vmatpush.msra.mxu0 0.0
    %308 = vmatpush.msra.mxu0 0.0
    %309 = vmatpush.msra.mxu0 0.0
    %310 = vmatpush.msra.mxu0 0.0
    %311 = vmatpush.msra.mxu0 0.0
    %312 = vmatpush.msra.mxu0 0.0
    %313 = vmatpush.msra.mxu0 0.0
    %314 = vmatpush.msra.mxu0 0.0
    %315 = vmatpush.msra.mxu0 0.0
    %316 = vmatpush.msra.mxu0 %v300
    %317 = vmatmul.f32.gmra.mxu0 %v73
    %v318 = vpop.f32.mrf.mxu0
    %v319 = vadd.f32 0.0, %v318
    %320 = vdwg.mxu0
    %v321 = vmul.f32 %v319, 0.125
    %v322 = vld [vmem:[%s240 + $0x80] sm:$0x3]
    %v323 = vadd.f32 %v321, 1e-05
    %v324 = vrsqrt.pop %v323
    %v325 = vmul.f32 %v324, %v323
    %v326 = vmul.f32 %v325, %v324
    %v327 = vmul.f32 0.5, %v326
    %v328 = vsub.f32 1.5, %v327
    %v329 = vmul.f32 %v324, %v328
    %vm330 = vweird.f32 %v323
    %vm331 = vweird.f32 %v324
    %vm332 = vmor %vm330, %vm331
    %v333 = vsel %vm332, %v324, %v329
    %v334 = vmul.f32 %v322, %v333
    %v335 = vperm.slane %v334, 0
    %v336 = vmul.f32 %v299, %v335
    %v337 = vperm.slane %v322, 1
    %v338 = vadd.f32 %v336, %v337
    %v339 = vmul.f32 %v338, 0.01
    %v340 = vmax.f32 %v338, %v339
    %341 = vst [vmem:[#allocation7] sm:$0xff] %v340
    // Predicated region
    $region18: #{tpu_custom_call.1} parent=1 // pred_check
      _
    $region19: #{tpu_custom_call.1} parent=1 // pred_check_branch
      %343 = sbr.rel (0) target = $region21
    $region20: #{tpu_custom_call.1} parent=1 // pred_region
      %345 = vsyncadd [#allocation4], 0
      %s347 = sshll.u32 [#allocation7], 4
      %s348 = int_to_ptr.vmem [resolvable:$true] %s347
      %s349 = sshll.u32 %s2, 4
      %s350 = int_to_ptr.hbm [resolvable:$true] %s349
      %352 = dma.vmem_to_hbm [thread:$0]  %s348, 128, %s350, [#allocation4]
    $region21: #{tpu_custom_call.1} parent=1 // pred_fallthru
      _
    // Predicated region
    $region22: #{tpu_custom_call.1} parent=1 // pred_check
      _
    $region23: #{tpu_custom_call.1} parent=1 // pred_check_branch
      %354 = sbr.rel (0) target = $region25
    $region24: #{tpu_custom_call.1} parent=1 // pred_region
      %356 = dma.done [#allocation4], 128
    $region25: #{tpu_custom_call.1} parent=1 // pred_fallthru
      _
    %357 = vsyncpa [#allocation3], 1
    %358 = vsyncpa [#allocation6], 1
    %359 = vsyncpa [#allocation4], 1

</llo_original>
